<compile_context>
chip_gen: v5e
topology: v5e:2x2
jax: 0.10.0
libtpu: 0.0.40
codegen_flags: <defaults>
</compile_context>

<pallas_src>
import jax
import jax.numpy as jnp
from jax.experimental import pallas as pl
from jax.experimental.pallas import tpu as pltpu


def _cxcywh2xyxy_kernel(x_ref, o_ref):
    # x_ref / o_ref: (tile_n, 4) blocks in VMEM; columns are (cx, cy, w, h).
    x = x_ref[...]
    cx = x[:, 0:1]
    cy = x[:, 1:2]
    half_w = x[:, 2:3] * 0.5
    half_h = x[:, 3:4] * 0.5
    o_ref[...] = jnp.concatenate(
        [cx - half_w, cy - half_h, cx + half_w, cy + half_h], axis=-1
    )


def cxcywh2xyxy(boxes, *, tile_n=256):
    """Convert boxes of shape (..., 4) from (cx, cy, w, h) to (x1, y1, x2, y2)."""
    assert boxes.shape[-1] == 4, "boxes must have last dim 4 (cx, cy, w, h)"
    orig_shape = boxes.shape
    m = 1
    for d in orig_shape[:-1]:
        m *= d
    x = boxes.reshape(m, 4)  # flatten leading dims; layout-preserving

    # Block second-minor dim must be a multiple of 8 or the full extent.
    tile = m if m <= tile_n else max((tile_n // 8) * 8, 8)
    grid = (pl.cdiv(m, tile),)

    out = pl.pallas_call(
        _cxcywh2xyxy_kernel,
        out_shape=jax.ShapeDtypeStruct((m, 4), boxes.dtype),
        grid_spec=pltpu.PrefetchScalarGridSpec(
            num_scalar_prefetch=0,
            grid=grid,
            in_specs=[pl.BlockSpec((tile, 4), lambda i: (i, 0))],
            out_specs=pl.BlockSpec((tile, 4), lambda i: (i, 0)),
        ),
        compiler_params=pltpu.CompilerParams(
            dimension_semantics=("parallel",)
        ),
    )(x)
    return out.reshape(orig_shape)


if __name__ == "__main__":
    key = jax.random.PRNGKey(0)
    k_center, k_size = jax.random.split(key)
    n = 1024  # small; exercises a 4-step grid with tile_n=256
    centers = jax.random.uniform(
        k_center, (n, 2), dtype=jnp.float32, minval=0.0, maxval=64.0
    )
    sizes = jax.random.uniform(
        k_size, (n, 2), dtype=jnp.float32, minval=1.0, maxval=16.0
    )
    cxcywh = jnp.concatenate([centers, sizes], axis=-1)  # (n, 4)

    xyxy = cxcywh2xyxy(cxcywh)
    jax.block_until_ready(xyxy)

    # Pure-JAX reference mirroring torchvision.ops.box_convert('cxcywh', 'xyxy').
    cx, cy, w, h = jnp.split(cxcywh, 4, axis=-1)
    ref = jnp.concatenate(
        [cx - 0.5 * w, cy - 0.5 * h, cx + 0.5 * w, cy + 0.5 * h], axis=-1
    )

    assert xyxy.shape == cxcywh.shape and xyxy.dtype == cxcywh.dtype
    assert jnp.allclose(xyxy, ref, atol=1e-6, rtol=0.0)

    print("KERNEL_OK")
</pallas_src>

<mosaic_0001>
module attributes {stable_mosaic.version = 11 : i64} {
  func.func @_cxcywh2xyxy_kernel(%arg0: i32, %arg1: memref<256x4xf32, #tpu.memory_space<vmem>>, %arg2: memref<256x4xf32, #tpu.memory_space<vmem>>) attributes {dimension_semantics = [#tpu.dimension_semantics<parallel>], iteration_bounds = array<i64: 4>, scalar_prefetch = 0 : i64, scratch_operands = 0 : i64, tpu.core_type = #tpu.core_type<tc>, window_params = [{transform_indices = @transform_0, window_bounds = array<i64: 256, 4>}, {transform_indices = @transform_1, window_bounds = array<i64: 256, 4>}]} {
    %c0 = arith.constant 0 : index
    %c0_0 = arith.constant 0 : index
    %0 = vector.load %arg1[%c0, %c0_0] : memref<256x4xf32, #tpu.memory_space<vmem>>, vector<256x4xf32>
    %1 = vector.extract_strided_slice %0 {offsets = [0, 0], sizes = [256, 1], strides = [1, 1]} : vector<256x4xf32> to vector<256x1xf32>
    %2 = vector.extract_strided_slice %0 {offsets = [0, 1], sizes = [256, 1], strides = [1, 1]} : vector<256x4xf32> to vector<256x1xf32>
    %3 = vector.extract_strided_slice %0 {offsets = [0, 2], sizes = [256, 1], strides = [1, 1]} : vector<256x4xf32> to vector<256x1xf32>
    %cst = arith.constant 5.000000e-01 : f32
    %4 = vector.broadcast %cst : f32 to vector<256x1xf32>
    %5 = arith.mulf %3, %4 : vector<256x1xf32>
    %6 = vector.extract_strided_slice %0 {offsets = [0, 3], sizes = [256, 1], strides = [1, 1]} : vector<256x4xf32> to vector<256x1xf32>
    %cst_1 = arith.constant 5.000000e-01 : f32
    %7 = vector.broadcast %cst_1 : f32 to vector<256x1xf32>
    %8 = arith.mulf %6, %7 : vector<256x1xf32>
    %9 = arith.subf %1, %5 : vector<256x1xf32>
    %10 = arith.subf %2, %8 : vector<256x1xf32>
    %11 = arith.addf %1, %5 : vector<256x1xf32>
    %12 = arith.addf %2, %8 : vector<256x1xf32>
    %13 = tpu.concatenate %9, %10, %11, %12 in 1 : vector<256x1xf32>, vector<256x1xf32>, vector<256x1xf32>, vector<256x1xf32> -> vector<256x4xf32>
    %c0_2 = arith.constant 0 : index
    %c0_3 = arith.constant 0 : index
    %14 = vector.load %arg2[%c0_2, %c0_3] : memref<256x4xf32, #tpu.memory_space<vmem>>, vector<256x4xf32>
    tpu.vector_store %arg2[%c0_2, %c0_3], %13 {strides = array<i32>} : memref<256x4xf32, #tpu.memory_space<vmem>>, vector<256x4xf32>,
    return
  }
  func.func @transform_0(%arg0: i32) -> (i32, i32) {
    %c0_i32 = arith.constant 0 : i32
    %c0_i32_0 = arith.constant 0 : i32
    return %arg0, %c0_i32 : i32, i32
  }
  func.func @transform_1(%arg0: i32) -> (i32, i32) {
    %c0_i32 = arith.constant 0 : i32
    %c0_i32_0 = arith.constant 0 : i32
    return %arg0, %c0_i32 : i32, i32
  }
}

</mosaic_0001>

<llo_original>
// kernel: tpu_custom_call.1
$region0: #{tpu_custom_call.1}
  #allocation0 [shape = 'u32[]', space=smem, size = 0x4, offset = 0x4, fixed_abs, tag = 'smem constant byte address 0x4 - core index']
  #allocation1 [shape = 'u32[72,128]{1,0:T(1,128)}', space=vmem, size = 0x9000, scoped, tag = 'internal scratch']
  %s0 = inlined_call_operand.vmem [shape: f32[1024,4], index: 0, kind: input, shape index: {}]
  %s1 = inlined_call_operand.vmem [shape: f32[1024,4], index: 1, kind: output, shape index: {}]
  %s2 = sld [smem:[#allocation0]]
  $region37: #{tpu_custom_call.1} parent=0
    _
  %s4 = ssub.s32 1, %s2
  %s5 = scalar_select 0, %s4, %s2
  loop: start=0, step=1, limit=6
  $region2: #{tpu_custom_call.1} parent=0 // loop_pre_header
    _
  $region3: #{tpu_custom_call.1} parent=0 // loop_header
    %s7 = sphi 0, %s11
    %p8 = scmp.ge.s32.totalorder %s7, 6
    %s17 = sphi 0, %s19
    %s20 = sphi 0, %s17
    %s21 = sphi 0, %s20
    %s37 = sphi 0, %s21
    %s43 = sphi 0, %s45
    %s46 = sphi 0, %s43
    %s47 = sphi 0, %s46
    %s63 = sphi 0, %s47
  $region4: #{tpu_custom_call.1} parent=0 // loop_header_branch
    %10 = sbr.rel (%p8) target = $region8
  $region5: #{tpu_custom_call.1} parent=0 // loop_body
    %s12 = ssub.s32 %s7, 1
    %s13 = ssub.s32 %s7, 2
    %s14 = sadd.s32 %s7, 1
    %s15 = ssub.s32 %s7, %s14
    %p16 = scmp.eq.s32.totalorder %s15, 0
    %s18 = sadd.s32 %s17, 1
    %s19 = scalar_select %p16, %s17, %s18
    %p22 = pneg %p16
    %p23 = scmp.eq.s32.totalorder %s7, 3
    %p24 = por %p22, %p23
    %p25 = scmp.ne.s32.totalorder %s17, %s20
    %p26 = scmp.eq.s32.totalorder %s7, 0
    %p27 = por %p25, %p26
    %p28 = scmp.ne.s32.totalorder %s17, %s20
    %p29 = scmp.eq.s32.totalorder %s12, 3
    %p30 = por %p28, %p29
    %p31 = scmp.ne.s32.totalorder %s20, %s21
    %p32 = scmp.eq.s32.totalorder %s12, 0
    %p33 = por %p31, %p32
    %p34 = scmp.ne.s32.totalorder %s20, %s21
    %p35 = scmp.eq.s32.totalorder %s13, 3
    %p36 = por %p34, %p35
    %p38 = scmp.ne.s32.totalorder %s21, %s37
    %p39 = scmp.eq.s32.totalorder %s13, 0
    %p40 = por %p38, %p39
    %s41 = ssub.s32 %s7, %s14
    %p42 = scmp.eq.s32.totalorder %s41, 0
    %s44 = sadd.s32 %s43, 1
    %s45 = scalar_select %p42, %s43, %s44
    %p48 = pneg %p42
    %p49 = scmp.eq.s32.totalorder %s7, 3
    %p50 = por %p48, %p49
    %p51 = scmp.ne.s32.totalorder %s43, %s46
    %p52 = scmp.eq.s32.totalorder %s7, 0
    %p53 = por %p51, %p52
    %p54 = scmp.ne.s32.totalorder %s43, %s46
    %p55 = scmp.eq.s32.totalorder %s12, 3
    %p56 = por %p54, %p55
    %p57 = scmp.ne.s32.totalorder %s46, %s47
    %p58 = scmp.eq.s32.totalorder %s12, 0
    %p59 = por %p57, %p58
    %p60 = scmp.ne.s32.totalorder %s46, %s47
    %p61 = scmp.eq.s32.totalorder %s13, 3
    %p62 = por %p60, %p61
    %p64 = scmp.ne.s32.totalorder %s47, %s63
    %p65 = scmp.eq.s32.totalorder %s13, 0
    %p66 = por %p64, %p65
    %p67 = scmp.le.s32.totalorder 1, %s7
    %p68 = scmp.lt.s32.totalorder %s7, 5
    %p69 = pnand %p67, %p68
    %p70 = pneg %p69
    // Predicated region
    $region9: #{tpu_custom_call.1} parent=5 // pred_check
      _
    $region10: #{tpu_custom_call.1} parent=5 // pred_check_branch
      %72 = sbr.rel (%p69) target = $region12
    $region11: #{tpu_custom_call.1} parent=5 // pred_region
      %s73 = ssub.s32 %s7, 1
    $region12: #{tpu_custom_call.1} parent=5 // pred_fallthru
      _
    %p74 = scmp.lt.s32.totalorder %s7, 4
    // Predicated region
    $region13: #{tpu_custom_call.1} parent=5 // pred_check
      %p75 = pneg %p74
    $region14: #{tpu_custom_call.1} parent=5 // pred_check_branch
      %77 = sbr.rel (%p75) target = $region16
    $region15: #{tpu_custom_call.1} parent=5 // pred_region
      // Predicated region
      $region17: #{tpu_custom_call.1} parent=15 // pred_check
        %p78 = pneg %p27
      $region18: #{tpu_custom_call.1} parent=15 // pred_check_branch
        %80 = sbr.rel (%p78) target = $region20
      $region19: #{tpu_custom_call.1} parent=15 // pred_region
        %s81 = smul.u32 32, %s7
        %p82 = scmp.lt.s32.totalorder %s81, 127
        %s83 = scalar_select %p82, %s81, 127
        %s84 = smul.addr %s83, 8
        %s85 = scalar_lea.vmem %s0, %s84
        %s86 = smul.u32 32, %s7
      $region20: #{tpu_custom_call.1} parent=15 // pred_fallthru
        _
    $region16: #{tpu_custom_call.1} parent=5 // pred_fallthru
      _
    %p87 = scmp.le.s32.totalorder 1, %s7
    %p88 = scmp.lt.s32.totalorder %s7, 5
    %p89 = pnand %p87, %p88
    %p90 = pneg %p89
    // Predicated region
    $region21: #{tpu_custom_call.1} parent=5 // pred_check
      _
    $region22: #{tpu_custom_call.1} parent=5 // pred_check_branch
      %92 = sbr.rel (%p89) target = $region24
    $region23: #{tpu_custom_call.1} parent=5 // pred_region
      %s93 = ssub.s32 %s7, 1
      %s94 = smul.u32 32, %s12
      %p95 = scmp.lt.s32.totalorder %s94, 127
      %s96 = scalar_select %p95, %s94, 127
      %s97 = smul.addr %s96, 8
      %s98 = scalar_lea.vmem %s0, %s97
      %p99 = pneg %p33
      %p100 = pneg %p30
      %p101 = pneg %p59
      %p102 = pneg %p56
      %s103 = smul.u32 32, %s12
      %p104 = scmp.lt.s32.totalorder %s103, 127
      %s105 = scalar_select %p104, %s103, 127
      %s106 = smul.addr %s105, 8
      %s107 = scalar_lea.vmem %s1, %s106
      %s108 = smul.u32 32, %s12
      %p109 = scmp.lt.s32.totalorder %s108, 127
      %s110 = scalar_select %p109, %s108, 127
      %s111 = smul.addr %s110, 8
      %s112 = scalar_lea.vmem %s0, %s111
      %s113 = smul.u32 32, %s12
      %s114 = smul.u32 32, %s12
      %p115 = scmp.lt.s32.totalorder %s114, 127
      %s116 = scalar_select %p115, %s114, 127
      %s117 = smul.addr %s116, 8
      %s118 = scalar_lea.vmem %s1, %s117
      %s119 = smul.u32 32, %s12
      %v120 = vld [vmem:[%s112] sm:$0xff]
      %v121 = vld [vmem:[%s112 + $0x8] sm:$0xff]
      %v122 = vld [vmem:[%s112 + $0x10] sm:$0xff]
      %v123 = vld [vmem:[%s112 + $0x18] sm:$0xff]
      %v124 = vld [vmem:[%s112 + $0x20] sm:$0xff]
      %v125 = vld [vmem:[%s112 + $0x28] sm:$0xff]
      %v126 = vld [vmem:[%s112 + $0x30] sm:$0xff]
      %v127 = vld [vmem:[%s112 + $0x38] sm:$0xff]
      %v128 = vld [vmem:[%s112 + $0x40] sm:$0xff]
      %v129 = vld [vmem:[%s112 + $0x48] sm:$0xff]
      %v130 = vld [vmem:[%s112 + $0x50] sm:$0xff]
      %v131 = vld [vmem:[%s112 + $0x58] sm:$0xff]
      %v132 = vld [vmem:[%s112 + $0x60] sm:$0xff]
      %v133 = vld [vmem:[%s112 + $0x68] sm:$0xff]
      %v134 = vld [vmem:[%s112 + $0x70] sm:$0xff]
      %v135 = vld [vmem:[%s112 + $0x78] sm:$0xff]
      %v136 = vld [vmem:[%s112 + $0x80] sm:$0xff]
      %v137 = vld [vmem:[%s112 + $0x88] sm:$0xff]
      %v138 = vld [vmem:[%s112 + $0x90] sm:$0xff]
      %v139 = vld [vmem:[%s112 + $0x98] sm:$0xff]
      %v140 = vld [vmem:[%s112 + $0xa0] sm:$0xff]
      %v141 = vld [vmem:[%s112 + $0xa8] sm:$0xff]
      %v142 = vld [vmem:[%s112 + $0xb0] sm:$0xff]
      %v143 = vld [vmem:[%s112 + $0xb8] sm:$0xff]
      %v144 = vld [vmem:[%s112 + $0xc0] sm:$0xff]
      %v145 = vld [vmem:[%s112 + $0xc8] sm:$0xff]
      %v146 = vld [vmem:[%s112 + $0xd0] sm:$0xff]
      %v147 = vld [vmem:[%s112 + $0xd8] sm:$0xff]
      %v148 = vld [vmem:[%s112 + $0xe0] sm:$0xff]
      %v149 = vld [vmem:[%s112 + $0xe8] sm:$0xff]
      %v150 = vld [vmem:[%s112 + $0xf0] sm:$0xff]
      %v151 = vld [vmem:[%s112 + $0xf8] sm:$0xff]
      %v152 = vmul.f32 %v120, 0.5
      %v153 = vmul.f32 %v121, 0.5
      %v154 = vmul.f32 %v122, 0.5
      %v155 = vmul.f32 %v123, 0.5
      %v156 = vmul.f32 %v124, 0.5
      %v157 = vmul.f32 %v125, 0.5
      %v158 = vmul.f32 %v126, 0.5
      %v159 = vmul.f32 %v127, 0.5
      %v160 = vmul.f32 %v128, 0.5
      %v161 = vmul.f32 %v129, 0.5
      %v162 = vmul.f32 %v130, 0.5
      %v163 = vmul.f32 %v131, 0.5
      %v164 = vmul.f32 %v132, 0.5
      %v165 = vmul.f32 %v133, 0.5
      %v166 = vmul.f32 %v134, 0.5
      %v167 = vmul.f32 %v135, 0.5
      %v168 = vmul.f32 %v136, 0.5
      %v169 = vmul.f32 %v137, 0.5
      %v170 = vmul.f32 %v138, 0.5
      %v171 = vmul.f32 %v139, 0.5
      %v172 = vmul.f32 %v140, 0.5
      %v173 = vmul.f32 %v141, 0.5
      %v174 = vmul.f32 %v142, 0.5
      %v175 = vmul.f32 %v143, 0.5
      %v176 = vmul.f32 %v144, 0.5
      %v177 = vmul.f32 %v145, 0.5
      %v178 = vmul.f32 %v146, 0.5
      %v179 = vmul.f32 %v147, 0.5
      %v180 = vmul.f32 %v148, 0.5
      %v181 = vmul.f32 %v149, 0.5
      %v182 = vmul.f32 %v150, 0.5
      %v183 = vmul.f32 %v151, 0.5
      %216 = vrot.lane.b32.xlu0 %v152, 126
      %v217 = vpop.permute.xlu0 %216
      %218 = vrot.lane.b32.xlu0 %v153, 126
      %v219 = vpop.permute.xlu0 %218
      %220 = vrot.lane.b32.xlu0 %v154, 126
      %v221 = vpop.permute.xlu0 %220
      %222 = vrot.lane.b32.xlu0 %v155, 126
      %v223 = vpop.permute.xlu0 %222
      %224 = vrot.lane.b32.xlu0 %v156, 126
      %v225 = vpop.permute.xlu0 %224
      %226 = vrot.lane.b32.xlu0 %v157, 126
      %v227 = vpop.permute.xlu0 %226
      %228 = vrot.lane.b32.xlu0 %v158, 126
      %v229 = vpop.permute.xlu0 %228
      %230 = vrot.lane.b32.xlu0 %v159, 126
      %v231 = vpop.permute.xlu0 %230
      %232 = vrot.lane.b32.xlu0 %v160, 126
      %v233 = vpop.permute.xlu0 %232
      %234 = vrot.lane.b32.xlu0 %v161, 126
      %v235 = vpop.permute.xlu0 %234
      %236 = vrot.lane.b32.xlu0 %v162, 126
      %v237 = vpop.permute.xlu0 %236
      %238 = vrot.lane.b32.xlu0 %v163, 126
      %v239 = vpop.permute.xlu0 %238
      %240 = vrot.lane.b32.xlu0 %v164, 126
      %v241 = vpop.permute.xlu0 %240
      %242 = vrot.lane.b32.xlu0 %v165, 126
      %v243 = vpop.permute.xlu0 %242
      %244 = vrot.lane.b32.xlu0 %v166, 126
      %v245 = vpop.permute.xlu0 %244
      %246 = vrot.lane.b32.xlu0 %v167, 126
      %v247 = vpop.permute.xlu0 %246
      %248 = vrot.lane.b32.xlu0 %v168, 126
      %v249 = vpop.permute.xlu0 %248
      %250 = vrot.lane.b32.xlu0 %v169, 126
      %v251 = vpop.permute.xlu0 %250
      %252 = vrot.lane.b32.xlu0 %v170, 126
      %v253 = vpop.permute.xlu0 %252
      %254 = vrot.lane.b32.xlu0 %v171, 126
      %v255 = vpop.permute.xlu0 %254
      %256 = vrot.lane.b32.xlu0 %v172, 126
      %v257 = vpop.permute.xlu0 %256
      %258 = vrot.lane.b32.xlu0 %v173, 126
      %v259 = vpop.permute.xlu0 %258
      %260 = vrot.lane.b32.xlu0 %v174, 126
      %v261 = vpop.permute.xlu0 %260
      %262 = vrot.lane.b32.xlu0 %v175, 126
      %v263 = vpop.permute.xlu0 %262
      %264 = vrot.lane.b32.xlu0 %v176, 126
      %v265 = vpop.permute.xlu0 %264
      %266 = vrot.lane.b32.xlu0 %v177, 126
      %v267 = vpop.permute.xlu0 %266
      %268 = vrot.lane.b32.xlu0 %v178, 126
      %v269 = vpop.permute.xlu0 %268
      %270 = vrot.lane.b32.xlu0 %v179, 126
      %v271 = vpop.permute.xlu0 %270
      %272 = vrot.lane.b32.xlu0 %v180, 126
      %v273 = vpop.permute.xlu0 %272
      %274 = vrot.lane.b32.xlu0 %v181, 126
      %v275 = vpop.permute.xlu0 %274
      %276 = vrot.lane.b32.xlu0 %v182, 126
      %v277 = vpop.permute.xlu0 %276
      %278 = vrot.lane.b32.xlu0 %v183, 126
      %v279 = vpop.permute.xlu0 %278
      %v312 = vsub.f32 %v120, %v217
      %v313 = vsub.f32 %v121, %v219
      %v314 = vsub.f32 %v122, %v221
      %v315 = vsub.f32 %v123, %v223
      %v316 = vsub.f32 %v124, %v225
      %v317 = vsub.f32 %v125, %v227
      %v318 = vsub.f32 %v126, %v229
      %v319 = vsub.f32 %v127, %v231
      %v320 = vsub.f32 %v128, %v233
      %v321 = vsub.f32 %v129, %v235
      %v322 = vsub.f32 %v130, %v237
      %v323 = vsub.f32 %v131, %v239
      %v324 = vsub.f32 %v132, %v241
      %v325 = vsub.f32 %v133, %v243
      %v326 = vsub.f32 %v134, %v245
      %v327 = vsub.f32 %v135, %v247
      %v328 = vsub.f32 %v136, %v249
      %v329 = vsub.f32 %v137, %v251
      %v330 = vsub.f32 %v138, %v253
      %v331 = vsub.f32 %v139, %v255
      %v332 = vsub.f32 %v140, %v257
      %v333 = vsub.f32 %v141, %v259
      %v334 = vsub.f32 %v142, %v261
      %v335 = vsub.f32 %v143, %v263
      %v336 = vsub.f32 %v144, %v265
      %v337 = vsub.f32 %v145, %v267
      %v338 = vsub.f32 %v146, %v269
      %v339 = vsub.f32 %v147, %v271
      %v340 = vsub.f32 %v148, %v273
      %v341 = vsub.f32 %v149, %v275
      %v342 = vsub.f32 %v150, %v277
      %v343 = vsub.f32 %v151, %v279
      %v344 = vadd.f32 %v120, %v217
      %v345 = vadd.f32 %v121, %v219
      %v346 = vadd.f32 %v122, %v221
      %v347 = vadd.f32 %v123, %v223
      %v348 = vadd.f32 %v124, %v225
      %v349 = vadd.f32 %v125, %v227
      %v350 = vadd.f32 %v126, %v229
      %v351 = vadd.f32 %v127, %v231
      %v352 = vadd.f32 %v128, %v233
      %v353 = vadd.f32 %v129, %v235
      %v354 = vadd.f32 %v130, %v237
      %v355 = vadd.f32 %v131, %v239
      %v356 = vadd.f32 %v132, %v241
      %v357 = vadd.f32 %v133, %v243
      %v358 = vadd.f32 %v134, %v245
      %v359 = vadd.f32 %v135, %v247
      %v360 = vadd.f32 %v136, %v249
      %v361 = vadd.f32 %v137, %v251
      %v362 = vadd.f32 %v138, %v253
      %v363 = vadd.f32 %v139, %v255
      %v364 = vadd.f32 %v140, %v257
      %v365 = vadd.f32 %v141, %v259
      %v366 = vadd.f32 %v142, %v261
      %v367 = vadd.f32 %v143, %v263
      %v368 = vadd.f32 %v144, %v265
      %v369 = vadd.f32 %v145, %v267
      %v370 = vadd.f32 %v146, %v269
      %v371 = vadd.f32 %v147, %v271
      %v372 = vadd.f32 %v148, %v273
      %v373 = vadd.f32 %v149, %v275
      %v374 = vadd.f32 %v150, %v277
      %v375 = vadd.f32 %v151, %v279
      %408 = vrot.lane.b32.xlu0 %v344, 2
      %v409 = vpop.permute.xlu0 %408
      %410 = vrot.lane.b32.xlu0 %v345, 2
      %v411 = vpop.permute.xlu0 %410
      %412 = vrot.lane.b32.xlu0 %v346, 2
      %v413 = vpop.permute.xlu0 %412
      %414 = vrot.lane.b32.xlu0 %v347, 2
      %v415 = vpop.permute.xlu0 %414
      %416 = vrot.lane.b32.xlu0 %v348, 2
      %v417 = vpop.permute.xlu0 %416
      %418 = vrot.lane.b32.xlu0 %v349, 2
      %v419 = vpop.permute.xlu0 %418
      %420 = vrot.lane.b32.xlu0 %v350, 2
      %v421 = vpop.permute.xlu0 %420
      %422 = vrot.lane.b32.xlu0 %v351, 2
      %v423 = vpop.permute.xlu0 %422
      %424 = vrot.lane.b32.xlu0 %v352, 2
      %v425 = vpop.permute.xlu0 %424
      %426 = vrot.lane.b32.xlu0 %v353, 2
      %v427 = vpop.permute.xlu0 %426
      %428 = vrot.lane.b32.xlu0 %v354, 2
      %v429 = vpop.permute.xlu0 %428
      %430 = vrot.lane.b32.xlu0 %v355, 2
      %v431 = vpop.permute.xlu0 %430
      %432 = vrot.lane.b32.xlu0 %v356, 2
      %v433 = vpop.permute.xlu0 %432
      %434 = vrot.lane.b32.xlu0 %v357, 2
      %v435 = vpop.permute.xlu0 %434
      %436 = vrot.lane.b32.xlu0 %v358, 2
      %v437 = vpop.permute.xlu0 %436
      %438 = vrot.lane.b32.xlu0 %v359, 2
      %v439 = vpop.permute.xlu0 %438
      %440 = vrot.lane.b32.xlu0 %v360, 2
      %v441 = vpop.permute.xlu0 %440
      %442 = vrot.lane.b32.xlu0 %v361, 2
      %v443 = vpop.permute.xlu0 %442
      %444 = vrot.lane.b32.xlu0 %v362, 2
      %v445 = vpop.permute.xlu0 %444
      %446 = vrot.lane.b32.xlu0 %v363, 2
      %v447 = vpop.permute.xlu0 %446
      %448 = vrot.lane.b32.xlu0 %v364, 2
      %v449 = vpop.permute.xlu0 %448
      %450 = vrot.lane.b32.xlu0 %v365, 2
      %v451 = vpop.permute.xlu0 %450
      %452 = vrot.lane.b32.xlu0 %v366, 2
      %v453 = vpop.permute.xlu0 %452
      %454 = vrot.lane.b32.xlu0 %v367, 2
      %v455 = vpop.permute.xlu0 %454
      %456 = vrot.lane.b32.xlu0 %v368, 2
      %v457 = vpop.permute.xlu0 %456
      %458 = vrot.lane.b32.xlu0 %v369, 2
      %v459 = vpop.permute.xlu0 %458
      %460 = vrot.lane.b32.xlu0 %v370, 2
      %v461 = vpop.permute.xlu0 %460
      %462 = vrot.lane.b32.xlu0 %v371, 2
      %v463 = vpop.permute.xlu0 %462
      %464 = vrot.lane.b32.xlu0 %v372, 2
      %v465 = vpop.permute.xlu0 %464
      %466 = vrot.lane.b32.xlu0 %v373, 2
      %v467 = vpop.permute.xlu0 %466
      %468 = vrot.lane.b32.xlu0 %v374, 2
      %v469 = vpop.permute.xlu0 %468
      %470 = vrot.lane.b32.xlu0 %v375, 2
      %v471 = vpop.permute.xlu0 %470
      %vm504 = vcmask 15360
      %v505 = vsel %vm504, %v312, %v409
      %v506 = vsel %vm504, %v313, %v411
      %v507 = vsel %vm504, %v314, %v413
      %v508 = vsel %vm504, %v315, %v415
      %v509 = vsel %vm504, %v316, %v417
      %v510 = vsel %vm504, %v317, %v419
      %v511 = vsel %vm504, %v318, %v421
      %v512 = vsel %vm504, %v319, %v423
      %v513 = vsel %vm504, %v320, %v425
      %v514 = vsel %vm504, %v321, %v427
      %v515 = vsel %vm504, %v322, %v429
      %v516 = vsel %vm504, %v323, %v431
      %v517 = vsel %vm504, %v324, %v433
      %v518 = vsel %vm504, %v325, %v435
      %v519 = vsel %vm504, %v326, %v437
      %v520 = vsel %vm504, %v327, %v439
      %v521 = vsel %vm504, %v328, %v441
      %v522 = vsel %vm504, %v329, %v443
      %v523 = vsel %vm504, %v330, %v445
      %v524 = vsel %vm504, %v331, %v447
      %v525 = vsel %vm504, %v332, %v449
      %v526 = vsel %vm504, %v333, %v451
      %v527 = vsel %vm504, %v334, %v453
      %v528 = vsel %vm504, %v335, %v455
      %v529 = vsel %vm504, %v336, %v457
      %v530 = vsel %vm504, %v337, %v459
      %v531 = vsel %vm504, %v338, %v461
      %v532 = vsel %vm504, %v339, %v463
      %v533 = vsel %vm504, %v340, %v465
      %v534 = vsel %vm504, %v341, %v467
      %v535 = vsel %vm504, %v342, %v469
      %v536 = vsel %vm504, %v343, %v471
      %vm537 = vcmask 23552
      %v538 = vsel %vm537, %v505, %v409
      %v539 = vsel %vm537, %v506, %v411
      %v540 = vsel %vm537, %v507, %v413
      %v541 = vsel %vm537, %v508, %v415
      %v542 = vsel %vm537, %v509, %v417
      %v543 = vsel %vm537, %v510, %v419
      %v544 = vsel %vm537, %v511, %v421
      %v545 = vsel %vm537, %v512, %v423
      %v546 = vsel %vm537, %v513, %v425
      %v547 = vsel %vm537, %v514, %v427
      %v548 = vsel %vm537, %v515, %v429
      %v549 = vsel %vm537, %v516, %v431
      %v550 = vsel %vm537, %v517, %v433
      %v551 = vsel %vm537, %v518, %v435
      %v552 = vsel %vm537, %v519, %v437
      %v553 = vsel %vm537, %v520, %v439
      %v554 = vsel %vm537, %v521, %v441
      %v555 = vsel %vm537, %v522, %v443
      %v556 = vsel %vm537, %v523, %v445
      %v557 = vsel %vm537, %v524, %v447
      %v558 = vsel %vm537, %v525, %v449
      %v559 = vsel %vm537, %v526, %v451
      %v560 = vsel %vm537, %v527, %v453
      %v561 = vsel %vm537, %v528, %v455
      %v562 = vsel %vm537, %v529, %v457
      %v563 = vsel %vm537, %v530, %v459
      %v564 = vsel %vm537, %v531, %v461
      %v565 = vsel %vm537, %v532, %v463
      %v566 = vsel %vm537, %v533, %v465
      %v567 = vsel %vm537, %v534, %v467
      %v568 = vsel %vm537, %v535, %v469
      %v569 = vsel %vm537, %v536, %v471
      %vm570 = vcmask 31744
      %571 = vst.msk [vmem:[%s118] sm:$0xff] %vm570, %v538
      %572 = vst.msk [vmem:[%s118 + $0x8] sm:$0xff] %vm570, %v539
      %573 = vst.msk [vmem:[%s118 + $0x10] sm:$0xff] %vm570, %v540
      %574 = vst.msk [vmem:[%s118 + $0x18] sm:$0xff] %vm570, %v541
      %575 = vst.msk [vmem:[%s118 + $0x20] sm:$0xff] %vm570, %v542
      %576 = vst.msk [vmem:[%s118 + $0x28] sm:$0xff] %vm570, %v543
      %577 = vst.msk [vmem:[%s118 + $0x30] sm:$0xff] %vm570, %v544
      %578 = vst.msk [vmem:[%s118 + $0x38] sm:$0xff] %vm570, %v545
      %579 = vst.msk [vmem:[%s118 + $0x40] sm:$0xff] %vm570, %v546
      %580 = vst.msk [vmem:[%s118 + $0x48] sm:$0xff] %vm570, %v547
      %581 = vst.msk [vmem:[%s118 + $0x50] sm:$0xff] %vm570, %v548
      %582 = vst.msk [vmem:[%s118 + $0x58] sm:$0xff] %vm570, %v549
      %583 = vst.msk [vmem:[%s118 + $0x60] sm:$0xff] %vm570, %v550
      %584 = vst.msk [vmem:[%s118 + $0x68] sm:$0xff] %vm570, %v551
      %585 = vst.msk [vmem:[%s118 + $0x70] sm:$0xff] %vm570, %v552
      %586 = vst.msk [vmem:[%s118 + $0x78] sm:$0xff] %vm570, %v553
      %587 = vst.msk [vmem:[%s118 + $0x80] sm:$0xff] %vm570, %v554
      %588 = vst.msk [vmem:[%s118 + $0x88] sm:$0xff] %vm570, %v555
      %589 = vst.msk [vmem:[%s118 + $0x90] sm:$0xff] %vm570, %v556
      %590 = vst.msk [vmem:[%s118 + $0x98] sm:$0xff] %vm570, %v557
      %591 = vst.msk [vmem:[%s118 + $0xa0] sm:$0xff] %vm570, %v558
      %592 = vst.msk [vmem:[%s118 + $0xa8] sm:$0xff] %vm570, %v559
      %593 = vst.msk [vmem:[%s118 + $0xb0] sm:$0xff] %vm570, %v560
      %594 = vst.msk [vmem:[%s118 + $0xb8] sm:$0xff] %vm570, %v561
      %595 = vst.msk [vmem:[%s118 + $0xc0] sm:$0xff] %vm570, %v562
      %596 = vst.msk [vmem:[%s118 + $0xc8] sm:$0xff] %vm570, %v563
      %597 = vst.msk [vmem:[%s118 + $0xd0] sm:$0xff] %vm570, %v564
      %598 = vst.msk [vmem:[%s118 + $0xd8] sm:$0xff] %vm570, %v565
      %599 = vst.msk [vmem:[%s118 + $0xe0] sm:$0xff] %vm570, %v566
      %600 = vst.msk [vmem:[%s118 + $0xe8] sm:$0xff] %vm570, %v567
      %601 = vst.msk [vmem:[%s118 + $0xf0] sm:$0xff] %vm570, %v568
      %602 = vst.msk [vmem:[%s118 + $0xf8] sm:$0xff] %vm570, %v569
      %s603 = smul.u32 32, %s12
      %p604 = scmp.lt.s32.totalorder %s603, 127
      %s605 = scalar_select %p604, %s603, 127
      %s606 = smul.addr %s605, 8
      %s607 = scalar_lea.vmem %s1, %s606
      // Predicated region
      $region25: #{tpu_custom_call.1} parent=23 // pred_check
        %p608 = pneg %p56
      $region26: #{tpu_custom_call.1} parent=23 // pred_check_branch
        %610 = sbr.rel (%p608) target = $region28
      $region27: #{tpu_custom_call.1} parent=23 // pred_region
        %s611 = smul.u32 32, %s12
      $region28: #{tpu_custom_call.1} parent=23 // pred_fallthru
        _
    $region24: #{tpu_custom_call.1} parent=5 // pred_fallthru
      _
    %p612 = scmp.le.s32.totalorder 2, %s7
    // Predicated region
    $region29: #{tpu_custom_call.1} parent=5 // pred_check
      %p613 = pneg %p612
    $region30: #{tpu_custom_call.1} parent=5 // pred_check_branch
      %615 = sbr.rel (%p613) target = $region32
    $region31: #{tpu_custom_call.1} parent=5 // pred_region
      %s616 = ssub.s32 %s7, 2
      // Predicated region
      $region33: #{tpu_custom_call.1} parent=31 // pred_check
        %p617 = pneg %p62
      $region34: #{tpu_custom_call.1} parent=31 // pred_check_branch
        %619 = sbr.rel (%p617) target = $region36
      $region35: #{tpu_custom_call.1} parent=31 // pred_region
        %s620 = smul.u32 32, %s13
        %p621 = scmp.lt.s32.totalorder %s620, 127
        %s622 = scalar_select %p621, %s620, 127
        %s623 = smul.addr %s622, 8
        %s624 = scalar_lea.vmem %s1, %s623
      $region36: #{tpu_custom_call.1} parent=31 // pred_fallthru
        _
    $region32: #{tpu_custom_call.1} parent=5 // pred_fallthru
      _
  $region6: #{tpu_custom_call.1} parent=0 // loop_footer
    %s11 = sadd.s32 1, %s7
  $region7: #{tpu_custom_call.1} parent=0 // loop_footer_branch
    %6 = sbr.rel target = $region3
  $region8: #{tpu_custom_call.1} parent=0 // loop_exit
    _

</llo_original>
